<compile_context>
chip_gen: v7x
topology: tpu7x:2x2x1
jax: 0.10.0
libtpu: 0.0.40
codegen_flags: <defaults>
</compile_context>

<pallas_src>
import jax
import jax.numpy as jnp
from jax.experimental import pallas as pl
from jax.experimental.pallas import tpu as pltpu

VISION_WIDTH = 64        # vision_width in the reference module
HIDDEN = 512             # self.hidden_size
CTX_LEN = 77             # CLIP context length (self.embedding has 77 rows)
VOCAB = 128              # synthetic (small) vocab for the text tokenizer
PATCH = 8                # synthetic ViT patch size
PATCH_DIM = 3 * PATCH * PATCH   # 192
LN_EPS = 1e-5            # matches torch.nn.LayerNorm default


def _round_up(n, m):
    return ((n + m - 1) // m) * m


# ----------------------------- Pallas kernel -------------------------------

def _fused_towers_kernel(img_ref, pproj_ref, vg_ref, vb_ref, vproj_ref,
                         txt_ref, tg_ref, tb_ref, tproj_ref,
                         img_o_ref, txt_o_ref):
    """One launch for both towers.

    Image stream: pooled-patch rows (bf16) -> patch-embed matmul ->
                  prompts_visual_ln (f32 stats) -> prompts_visual_proj.
    Text stream : EOT-row embeddings (f32) -> ln_final (f32 stats) ->
                  text_projection.
    """
    # ---- image tower ----
    # Patches were mean-pooled per image BEFORE the kernel (linearity), so a
    # single (M_pad, PD) @ (PD, 64) MXU matmul replaces matmul + pool-matmul.
    feat = jnp.dot(img_ref[...], pproj_ref[...],
                   preferred_element_type=jnp.float32)              # (Mp, 64) f32
    mean = jnp.mean(feat, axis=-1, keepdims=True)
    cen = feat - mean
    var = jnp.mean(cen * cen, axis=-1, keepdims=True)
    xn = cen * jax.lax.rsqrt(var + LN_EPS) * vg_ref[...] + vb_ref[...]
    # prompts_visual_proj; output is lane-dense (N=512) -> unmasked stores.
    img_o_ref[...] = jnp.dot(xn.astype(jnp.bfloat16), vproj_ref[...],
                             preferred_element_type=jnp.float32)

    # ---- text tower (only the A EOT rows ever reach the kernel) ----
    x = txt_ref[...]
    tmean = jnp.mean(x, axis=-1, keepdims=True)
    tcen = x - tmean
    tvar = jnp.mean(tcen * tcen, axis=-1, keepdims=True)
    txn = tcen * jax.lax.rsqrt(tvar + LN_EPS) * tg_ref[...] + tb_ref[...]
    txt_o_ref[...] = jnp.dot(txn.astype(jnp.bfloat16), tproj_ref[...],
                             preferred_element_type=jnp.float32)


def fused_towers_pallas(pooled, pproj, vg, vb, vproj, x_eot, tg, tb, tproj):
    """pooled:(Mp,PD) bf16, pproj:(PD,D) bf16, vg/vb:(1,D) f32, vproj:(D,N) bf16,
    x_eot:(Ap,H) f32, tg/tb:(1,H) f32, tproj:(H,H) bf16 -> ((Mp,N), (Ap,H)) f32."""
    Mp, PD = pooled.shape
    D = pproj.shape[1]
    N = vproj.shape[1]
    Ap, H = x_eot.shape
    Ht = tproj.shape[1]

    flops = 2 * (Mp * PD * D + Mp * D * N + Ap * H * Ht)
    bytes_accessed = (pooled.size * 2 + pproj.size * 2 + vproj.size * 2
                      + tproj.size * 2 + x_eot.size * 4
                      + (vg.size + vb.size + tg.size + tb.size) * 4
                      + Mp * N * 4 + Ap * Ht * 4)

    return pl.pallas_call(
        _fused_towers_kernel,
        out_shape=(jax.ShapeDtypeStruct((Mp, N), jnp.float32),
                   jax.ShapeDtypeStruct((Ap, Ht), jnp.float32)),
        grid=(1,),
        in_specs=[pl.BlockSpec((Mp, PD), lambda i: (0, 0)),
                  pl.BlockSpec((PD, D), lambda i: (0, 0)),
                  pl.BlockSpec((1, D), lambda i: (0, 0)),
                  pl.BlockSpec((1, D), lambda i: (0, 0)),
                  pl.BlockSpec((D, N), lambda i: (0, 0)),
                  pl.BlockSpec((Ap, H), lambda i: (0, 0)),
                  pl.BlockSpec((1, H), lambda i: (0, 0)),
                  pl.BlockSpec((1, H), lambda i: (0, 0)),
                  pl.BlockSpec((H, Ht), lambda i: (0, 0))],
        out_specs=(pl.BlockSpec((Mp, N), lambda i: (0, 0)),
                   pl.BlockSpec((Ap, Ht), lambda i: (0, 0))),
        compiler_params=pltpu.CompilerParams(dimension_semantics=("arbitrary",)),
        cost_estimate=pl.CostEstimate(flops=flops, transcendentals=Mp + Ap,
                                      bytes_accessed=bytes_accessed),
    )(pooled, pproj, vg, vb, vproj, x_eot, tg, tb, tproj)


# ------------------------------ parameters ---------------------------------

def init_params(key):
    ks = jax.random.split(key, 5)
    return {
        # synthetic CLIP-lite image tower (weights pre-cast to bf16 once)
        'patch_proj': (jax.random.normal(
            ks[0], (PATCH_DIM, VISION_WIDTH), jnp.float32) * 0.02
            ).astype(jnp.bfloat16),
        # module's own prompts_visual_ln = LayerNorm(vision_width), default init
        'visual_ln_w': jnp.ones((1, VISION_WIDTH), jnp.float32),
        'visual_ln_b': jnp.zeros((1, VISION_WIDTH), jnp.float32),
        # module's own prompts_visual_proj = Parameter(randn(vision_width, 512))
        'visual_proj': jax.random.normal(
            ks[1], (VISION_WIDTH, HIDDEN), jnp.float32).astype(jnp.bfloat16),
        # synthetic CLIP-lite text tower
        'token_embed': jax.random.normal(
            ks[2], (VOCAB, HIDDEN), jnp.float32) * 0.02,
        # module's own self.embedding = Embedding(77, 512), normal std=0.01
        'pos_embed': jax.random.normal(
            ks[3], (CTX_LEN, HIDDEN), jnp.float32) * 0.01,
        'text_ln_w': jnp.ones((1, HIDDEN), jnp.float32),
        'text_ln_b': jnp.zeros((1, HIDDEN), jnp.float32),
        'text_proj': (jax.random.normal(
            ks[4], (HIDDEN, HIDDEN), jnp.float32) * 0.02).astype(jnp.bfloat16),
    }


# ------------------------------ preprocessing ------------------------------

def _patchify_mean(imgs):
    """NCHW f32 -> per-image mean over patches (linearity: mean-before-proj).

    Returns (N, C*PATCH*PATCH) bf16.  Mean is taken in f32, with a single bf16
    rounding right before the MXU (more accurate than pooling a bf16-rounded
    patch_feat), and the bf16 cast halves the kernel's largest input DMA.
    """
    N, C, H, W = imgs.shape
    ph, pw = H // PATCH, W // PATCH
    x = imgs.reshape(N, C, ph, PATCH, pw, PATCH)
    x = jnp.transpose(x, (0, 2, 4, 1, 3, 5))            # N, ph, pw, C, p, p
    x = x.reshape(N, ph * pw, C * PATCH * PATCH)        # N, num_p, PD
    return jnp.mean(x, axis=1).astype(jnp.bfloat16)     # (N, PD) bf16


# ------------------------------ forward ------------------------------------

@jax.jit
def _forward_core(params, actiontokens, images, person_crops, object_crops,
                  prompt_images):
    # ---- text: gather ONLY the A EOT rows (never build (A,77,512)) ----
    A = actiontokens.shape[0]
    # argmax locates EOT assuming EOT id is the maximum token id (CLIP-true).
    eot = jnp.argmax(actiontokens, axis=-1)                              # (A,)
    eot_tok = jnp.take_along_axis(actiontokens, eot[:, None], axis=1)[:, 0]
    x_eot = (jnp.take(params['token_embed'], eot_tok, axis=0)
             + jnp.take(params['pos_embed'], eot, axis=0))               # (A,512) f32
    A_pad = _round_up(A, 8)
    if A_pad != A:
        # zero pad rows: LN gives 0*rsqrt(eps)+beta, finite, sliced off below
        x_eot = jnp.pad(x_eot, ((0, A_pad - A), (0, 0)))

    # ---- images: all four streams through ONE fused launch ----
    all_imgs = jnp.concatenate(
        [images, person_crops, object_crops, prompt_images], axis=0)
    M = all_imgs.shape[0]
    pooled = _patchify_mean(all_imgs.astype(jnp.float32))                # (M, PD) bf16
    M_pad = _round_up(M, 8)
    if M_pad != M:
        pooled = jnp.pad(pooled, ((0, M_pad - M), (0, 0)))

    img_feats, txt_feats = fused_towers_pallas(
        pooled, params['patch_proj'], params['visual_ln_w'],
        params['visual_ln_b'], params['visual_proj'],
        x_eot, params['text_ln_w'], params['text_ln_b'], params['text_proj'])

    tFeature = txt_feats[:A]                                             # (A, 512)
    feats = img_feats[:M]                                                # (M, 512)
    n0, n1, n2 = images.shape[0], person_crops.shape[0], object_crops.shape[0]
    iFeature = feats[:n0][:, :, None, None, None]
    person_feature = feats[n0:n0 + n1][:, :, None, None, None]
    object_feature = feats[n0 + n1:n0 + n1 + n2][:, :, None, None, None]
    prompt_iFeature = feats[n0 + n1 + n2:]
    return tFeature, iFeature, person_feature, object_feature, prompt_iFeature


def clipencoder_forward(params, actiontokens, images, person_crops,
                        person_bbox, object_crops, prompt_images):
    """Mirrors CLIPencoder.forward(image_paths, proposals, objects)."""
    tF, iF, pF, oF, piF = _forward_core(params, actiontokens, images,
                                        person_crops, object_crops,
                                        prompt_images)
    return tF, iF, pF, oF, piF, person_bbox


# -------------------------------- main --------------------------------------

if __name__ == "__main__":
    key = jax.random.PRNGKey(0)
    kp, ki, kc1, kc2, kc3, kt = jax.random.split(key, 6)

    params = init_params(kp)

    # action tokens: 4 actions, context length 77, EOT = max id at position 6
    A = 4
    tokens = jnp.zeros((A, CTX_LEN), jnp.int32)
    tokens = tokens.at[:, 0].set(1)
    tokens = tokens.at[:, 1:6].set(
        jax.random.randint(kt, (A, 5), 2, VOCAB - 1, dtype=jnp.int32))
    tokens = tokens.at[:, 6].set(VOCAB - 1)

    # pre-decoded / pre-cropped NCHW images (stand-ins for PIL + preprocess)
    images        = jax.random.normal(ki,  (2, 3, 16, 16), jnp.float32)  # whole frames
    person_crops  = jax.random.normal(kc1, (3, 3, 16, 16), jnp.float32)  # 3 person boxes
    object_crops  = jax.random.normal(kc2, (2, 3, 16, 16), jnp.float32)  # 2 kept objects
    prompt_images = jax.random.normal(kc3, (3, 3, 16, 16), jnp.float32)  # frame per box
    person_bbox   = [[(0, 0, 8, 8), (4, 4, 12, 12)], [(2, 2, 10, 10)]]

    outs = clipencoder_forward(params, tokens, images, person_crops,
                               person_bbox, object_crops, prompt_images)
    tF, iF, pF, oF, piF, pbox = outs
    jax.block_until_ready((tF, iF, pF, oF, piF))

    assert tF.shape == (A, HIDDEN) and tF.dtype == jnp.float32
    assert iF.shape == (2, HIDDEN, 1, 1, 1) and iF.dtype == jnp.float32
    assert pF.shape == (3, HIDDEN, 1, 1, 1)
    assert oF.shape == (2, HIDDEN, 1, 1, 1)
    assert piF.shape == (3, HIDDEN)
    assert bool(jnp.all(jnp.isfinite(tF))) and bool(jnp.all(jnp.isfinite(piF)))
    assert bool(jnp.all(jnp.isfinite(iF)))
    print("KERNEL_OK")
</pallas_src>

<mosaic_0001>
module attributes {stable_mosaic.version = 11 : i64} {
  func.func @_fused_towers_kernel(%arg0: i32, %arg1: memref<16x192xbf16, #tpu.memory_space<vmem>>, %arg2: memref<192x64xbf16, #tpu.memory_space<vmem>>, %arg3: memref<1x64xf32, #tpu.memory_space<vmem>>, %arg4: memref<1x64xf32, #tpu.memory_space<vmem>>, %arg5: memref<64x512xbf16, #tpu.memory_space<vmem>>, %arg6: memref<8x512xf32, #tpu.memory_space<vmem>>, %arg7: memref<1x512xf32, #tpu.memory_space<vmem>>, %arg8: memref<1x512xf32, #tpu.memory_space<vmem>>, %arg9: memref<512x512xbf16, #tpu.memory_space<vmem>>, %arg10: memref<16x512xf32, #tpu.memory_space<vmem>>, %arg11: memref<8x512xf32, #tpu.memory_space<vmem>>) attributes {dimension_semantics = [#tpu.dimension_semantics<arbitrary>], iteration_bounds = array<i64: 1>, scalar_prefetch = 0 : i64, scratch_operands = 0 : i64, tpu.core_type = #tpu.core_type<tc>, window_params = [{pipeline_mode = #tpu.pipeline_mode<synchronous>, transform_indices = @transform_0, window_bounds = array<i64: 16, 192>}, {pipeline_mode = #tpu.pipeline_mode<synchronous>, transform_indices = @transform_1, window_bounds = array<i64: 192, 64>}, {pipeline_mode = #tpu.pipeline_mode<synchronous>, transform_indices = @transform_2, window_bounds = array<i64: 1, 64>}, {pipeline_mode = #tpu.pipeline_mode<synchronous>, transform_indices = @transform_3, window_bounds = array<i64: 1, 64>}, {pipeline_mode = #tpu.pipeline_mode<synchronous>, transform_indices = @transform_4, window_bounds = array<i64: 64, 512>}, {pipeline_mode = #tpu.pipeline_mode<synchronous>, transform_indices = @transform_5, window_bounds = array<i64: 8, 512>}, {pipeline_mode = #tpu.pipeline_mode<synchronous>, transform_indices = @transform_6, window_bounds = array<i64: 1, 512>}, {pipeline_mode = #tpu.pipeline_mode<synchronous>, transform_indices = @transform_7, window_bounds = array<i64: 1, 512>}, {pipeline_mode = #tpu.pipeline_mode<synchronous>, transform_indices = @transform_8, window_bounds = array<i64: 512, 512>}, {pipeline_mode = #tpu.pipeline_mode<synchronous>, transform_indices = @transform_9, window_bounds = array<i64: 16, 512>}, {pipeline_mode = #tpu.pipeline_mode<synchronous>, transform_indices = @transform_10, window_bounds = array<i64: 8, 512>}]} {
    %c0 = arith.constant 0 : index
    %c0_0 = arith.constant 0 : index
    %0 = vector.load %arg1[%c0, %c0_0] : memref<16x192xbf16, #tpu.memory_space<vmem>>, vector<16x192xbf16>
    %c0_1 = arith.constant 0 : index
    %c0_2 = arith.constant 0 : index
    %1 = vector.load %arg2[%c0_1, %c0_2] : memref<192x64xbf16, #tpu.memory_space<vmem>>, vector<192x64xbf16>
    %cst = arith.constant dense<0.000000e+00> : vector<16x64xf32>
    %2 = tpu.matmul %0, %1, %cst {dimension_numbers = #tpu.dot_dimension_numbers<[1], [0], [0], [1], [0, 0, 1, 1], [], []>} : vector<16x192xbf16>, vector<192x64xbf16>, vector<16x64xf32> -> vector<16x64xf32>
    %cst_3 = arith.constant dense<0.000000e+00> : vector<16xf32>
    %3 = vector.multi_reduction <add>, %2, %cst_3 [1] : vector<16x64xf32> to vector<16xf32>
    %4 = vector.shape_cast %3 : vector<16xf32> to vector<16x1xf32>
    %cst_4 = arith.constant 6.400000e+01 : f32
    %5 = vector.broadcast %cst_4 : f32 to vector<16x1xf32>
    %6 = arith.divf %4, %5 : vector<16x1xf32>
    %7 = vector.broadcast %6 : vector<16x1xf32> to vector<16x64xf32>
    %8 = arith.subf %2, %7 : vector<16x64xf32>
    %9 = arith.mulf %8, %8 : vector<16x64xf32>
    %cst_5 = arith.constant dense<0.000000e+00> : vector<16xf32>
    %10 = vector.multi_reduction <add>, %9, %cst_5 [1] : vector<16x64xf32> to vector<16xf32>
    %11 = vector.shape_cast %10 : vector<16xf32> to vector<16x1xf32>
    %cst_6 = arith.constant 6.400000e+01 : f32
    %12 = vector.broadcast %cst_6 : f32 to vector<16x1xf32>
    %13 = arith.divf %11, %12 : vector<16x1xf32>
    %cst_7 = arith.constant 9.99999974E-6 : f32
    %14 = vector.broadcast %cst_7 : f32 to vector<16x1xf32>
    %15 = arith.addf %13, %14 : vector<16x1xf32>
    %16 = math.rsqrt %15 : vector<16x1xf32>
    %17 = vector.broadcast %16 : vector<16x1xf32> to vector<16x64xf32>
    %18 = arith.mulf %8, %17 : vector<16x64xf32>
    %c0_8 = arith.constant 0 : index
    %c0_9 = arith.constant 0 : index
    %19 = vector.load %arg3[%c0_8, %c0_9] : memref<1x64xf32, #tpu.memory_space<vmem>>, vector<1x64xf32>
    %20 = vector.broadcast %19 : vector<1x64xf32> to vector<16x64xf32>
    %21 = arith.mulf %18, %20 : vector<16x64xf32>
    %c0_10 = arith.constant 0 : index
    %c0_11 = arith.constant 0 : index
    %22 = vector.load %arg4[%c0_10, %c0_11] : memref<1x64xf32, #tpu.memory_space<vmem>>, vector<1x64xf32>
    %23 = vector.broadcast %22 : vector<1x64xf32> to vector<16x64xf32>
    %24 = arith.addf %21, %23 : vector<16x64xf32>
    %25 = arith.truncf %24 : vector<16x64xf32> to vector<16x64xbf16>
    %c0_12 = arith.constant 0 : index
    %c0_13 = arith.constant 0 : index
    %26 = vector.load %arg5[%c0_12, %c0_13] : memref<64x512xbf16, #tpu.memory_space<vmem>>, vector<64x512xbf16>
    %cst_14 = arith.constant dense<0.000000e+00> : vector<16x512xf32>
    %27 = tpu.matmul %25, %26, %cst_14 {dimension_numbers = #tpu.dot_dimension_numbers<[1], [0], [0], [1], [0, 0, 1, 1], [], []>} : vector<16x64xbf16>, vector<64x512xbf16>, vector<16x512xf32> -> vector<16x512xf32>
    %c0_15 = arith.constant 0 : index
    %c0_16 = arith.constant 0 : index
    %28 = vector.load %arg10[%c0_15, %c0_16] : memref<16x512xf32, #tpu.memory_space<vmem>>, vector<16x512xf32>
    tpu.vector_store %arg10[%c0_15, %c0_16], %27 {strides = array<i32>} : memref<16x512xf32, #tpu.memory_space<vmem>>, vector<16x512xf32>,
    %c0_17 = arith.constant 0 : index
    %c0_18 = arith.constant 0 : index
    %29 = vector.load %arg6[%c0_17, %c0_18] : memref<8x512xf32, #tpu.memory_space<vmem>>, vector<8x512xf32>
    %cst_19 = arith.constant dense<0.000000e+00> : vector<8xf32>
    %30 = vector.multi_reduction <add>, %29, %cst_19 [1] : vector<8x512xf32> to vector<8xf32>
    %31 = vector.shape_cast %30 : vector<8xf32> to vector<8x1xf32>
    %cst_20 = arith.constant 5.120000e+02 : f32
    %32 = vector.broadcast %cst_20 : f32 to vector<8x1xf32>
    %33 = arith.divf %31, %32 : vector<8x1xf32>
    %34 = vector.broadcast %33 : vector<8x1xf32> to vector<8x512xf32>
    %35 = arith.subf %29, %34 : vector<8x512xf32>
    %36 = arith.mulf %35, %35 : vector<8x512xf32>
    %cst_21 = arith.constant dense<0.000000e+00> : vector<8xf32>
    %37 = vector.multi_reduction <add>, %36, %cst_21 [1] : vector<8x512xf32> to vector<8xf32>
    %38 = vector.shape_cast %37 : vector<8xf32> to vector<8x1xf32>
    %cst_22 = arith.constant 5.120000e+02 : f32
    %39 = vector.broadcast %cst_22 : f32 to vector<8x1xf32>
    %40 = arith.divf %38, %39 : vector<8x1xf32>
    %cst_23 = arith.constant 9.99999974E-6 : f32
    %41 = vector.broadcast %cst_23 : f32 to vector<8x1xf32>
    %42 = arith.addf %40, %41 : vector<8x1xf32>
    %43 = math.rsqrt %42 : vector<8x1xf32>
    %44 = vector.broadcast %43 : vector<8x1xf32> to vector<8x512xf32>
    %45 = arith.mulf %35, %44 : vector<8x512xf32>
    %c0_24 = arith.constant 0 : index
    %c0_25 = arith.constant 0 : index
    %46 = vector.load %arg7[%c0_24, %c0_25] : memref<1x512xf32, #tpu.memory_space<vmem>>, vector<1x512xf32>
    %47 = vector.broadcast %46 : vector<1x512xf32> to vector<8x512xf32>
    %48 = arith.mulf %45, %47 : vector<8x512xf32>
    %c0_26 = arith.constant 0 : index
    %c0_27 = arith.constant 0 : index
    %49 = vector.load %arg8[%c0_26, %c0_27] : memref<1x512xf32, #tpu.memory_space<vmem>>, vector<1x512xf32>
    %50 = vector.broadcast %49 : vector<1x512xf32> to vector<8x512xf32>
    %51 = arith.addf %48, %50 : vector<8x512xf32>
    %52 = arith.truncf %51 : vector<8x512xf32> to vector<8x512xbf16>
    %c0_28 = arith.constant 0 : index
    %c0_29 = arith.constant 0 : index
    %53 = vector.load %arg9[%c0_28, %c0_29] : memref<512x512xbf16, #tpu.memory_space<vmem>>, vector<512x512xbf16>
    %cst_30 = arith.constant dense<0.000000e+00> : vector<8x512xf32>
    %54 = tpu.matmul %52, %53, %cst_30 {dimension_numbers = #tpu.dot_dimension_numbers<[1], [0], [0], [1], [0, 0, 1, 1], [], []>} : vector<8x512xbf16>, vector<512x512xbf16>, vector<8x512xf32> -> vector<8x512xf32>
    %c0_31 = arith.constant 0 : index
    %c0_32 = arith.constant 0 : index
    %55 = vector.load %arg11[%c0_31, %c0_32] : memref<8x512xf32, #tpu.memory_space<vmem>>, vector<8x512xf32>
    tpu.vector_store %arg11[%c0_31, %c0_32], %54 {strides = array<i32>} : memref<8x512xf32, #tpu.memory_space<vmem>>, vector<8x512xf32>,
    return
  }
  func.func @transform_0(%arg0: i32) -> (i32, i32) {
    %c0_i32 = arith.constant 0 : i32
    %c0_i32_0 = arith.constant 0 : i32
    %c0_i32_1 = arith.constant 0 : i32
    return %c0_i32, %c0_i32_0 : i32, i32
  }
  func.func @transform_1(%arg0: i32) -> (i32, i32) {
    %c0_i32 = arith.constant 0 : i32
    %c0_i32_0 = arith.constant 0 : i32
    %c0_i32_1 = arith.constant 0 : i32
    return %c0_i32, %c0_i32_0 : i32, i32
  }
  func.func @transform_2(%arg0: i32) -> (i32, i32) {
    %c0_i32 = arith.constant 0 : i32
    %c0_i32_0 = arith.constant 0 : i32
    %c0_i32_1 = arith.constant 0 : i32
    return %c0_i32, %c0_i32_0 : i32, i32
  }
  func.func @transform_3(%arg0: i32) -> (i32, i32) {
    %c0_i32 = arith.constant 0 : i32
    %c0_i32_0 = arith.constant 0 : i32
    %c0_i32_1 = arith.constant 0 : i32
    return %c0_i32, %c0_i32_0 : i32, i32
  }
  func.func @transform_4(%arg0: i32) -> (i32, i32) {
    %c0_i32 = arith.constant 0 : i32
    %c0_i32_0 = arith.constant 0 : i32
    %c0_i32_1 = arith.constant 0 : i32
    return %c0_i32, %c0_i32_0 : i32, i32
  }
  func.func @transform_5(%arg0: i32) -> (i32, i32) {
    %c0_i32 = arith.constant 0 : i32
    %c0_i32_0 = arith.constant 0 : i32
    %c0_i32_1 = arith.constant 0 : i32
    return %c0_i32, %c0_i32_0 : i32, i32
  }
  func.func @transform_6(%arg0: i32) -> (i32, i32) {
    %c0_i32 = arith.constant 0 : i32
    %c0_i32_0 = arith.constant 0 : i32
    %c0_i32_1 = arith.constant 0 : i32
    return %c0_i32, %c0_i32_0 : i32, i32
  }
  func.func @transform_7(%arg0: i32) -> (i32, i32) {
    %c0_i32 = arith.constant 0 : i32
    %c0_i32_0 = arith.constant 0 : i32
    %c0_i32_1 = arith.constant 0 : i32
    return %c0_i32, %c0_i32_0 : i32, i32
  }
  func.func @transform_8(%arg0: i32) -> (i32, i32) {
    %c0_i32 = arith.constant 0 : i32
    %c0_i32_0 = arith.constant 0 : i32
    %c0_i32_1 = arith.constant 0 : i32
    return %c0_i32, %c0_i32_0 : i32, i32
  }
  func.func @transform_9(%arg0: i32) -> (i32, i32) {
    %c0_i32 = arith.constant 0 : i32
    %c0_i32_0 = arith.constant 0 : i32
    %c0_i32_1 = arith.constant 0 : i32
    return %c0_i32, %c0_i32_0 : i32, i32
  }
  func.func @transform_10(%arg0: i32) -> (i32, i32) {
    %c0_i32 = arith.constant 0 : i32
    %c0_i32_0 = arith.constant 0 : i32
    %c0_i32_1 = arith.constant 0 : i32
    return %c0_i32, %c0_i32_0 : i32, i32
  }
}

</mosaic_0001>

<llo_original>
// kernel: _forward_core.1
$region0: #{_forward_core.1}
  #allocation0 [shape = 'u32[]', space=smem, size = 0x4, offset = 0x4, fixed_abs, tag = 'smem constant byte address 0x4 - core index']
  #allocation1 [shape = 'u32[144,128]{1,0:T(1,128)}', space=vmem, size = 0x12000, scoped, tag = 'internal scratch']
  %s0 = inlined_call_operand.vmem [shape: bf16[16,192], index: 0, kind: input, shape index: {}]
  %s1 = inlined_call_operand.vmem [shape: bf16[192,64], index: 1, kind: input, shape index: {}]
  %s2 = inlined_call_operand.vmem [shape: f32[1,64], index: 2, kind: input, shape index: {}]
  %s3 = inlined_call_operand.vmem [shape: f32[1,64], index: 3, kind: input, shape index: {}]
  %s4 = inlined_call_operand.vmem [shape: bf16[64,512], index: 4, kind: input, shape index: {}]
  %s5 = inlined_call_operand.vmem [shape: f32[8,512], index: 5, kind: input, shape index: {}]
  %s6 = inlined_call_operand.vmem [shape: f32[1,512], index: 6, kind: input, shape index: {}]
  %s7 = inlined_call_operand.vmem [shape: f32[1,512], index: 7, kind: input, shape index: {}]
  %s8 = inlined_call_operand.vmem [shape: bf16[512,512], index: 8, kind: input, shape index: {}]
  %s9 = inlined_call_operand.vmem [shape: f32[16,512], index: 9, kind: output, shape index: {0}]
  %s10 = inlined_call_operand.vmem [shape: f32[8,512], index: 10, kind: output, shape index: {1}]
  %11 = xla_tuple %s9, %s10
  %s12 = sld [smem:[#allocation0]]
  $region54: #{_forward_core.1} parent=0
    _
  %s14 = ssub.s32 1, %s12
  %s15 = scalar_select 0, %s14, %s12
  // Predicated region
  $region2: #{_forward_core.1} parent=0 // pred_check
    _
  $region3: #{_forward_core.1} parent=0 // pred_check_branch
    %17 = sbr.rel (0) target = $region5
  $region4: #{_forward_core.1} parent=0 // pred_region
    _
  $region5: #{_forward_core.1} parent=0 // pred_fallthru
    _
  // Predicated region
  $region6: #{_forward_core.1} parent=0 // pred_check
    _
  $region7: #{_forward_core.1} parent=0 // pred_check_branch
    %19 = sbr.rel (0) target = $region9
  $region8: #{_forward_core.1} parent=0 // pred_region
    _
  $region9: #{_forward_core.1} parent=0 // pred_fallthru
    _
  // Predicated region
  $region10: #{_forward_core.1} parent=0 // pred_check
    _
  $region11: #{_forward_core.1} parent=0 // pred_check_branch
    %21 = sbr.rel (0) target = $region13
  $region12: #{_forward_core.1} parent=0 // pred_region
    _
  $region13: #{_forward_core.1} parent=0 // pred_fallthru
    _
  // Predicated region
  $region14: #{_forward_core.1} parent=0 // pred_check
    _
  $region15: #{_forward_core.1} parent=0 // pred_check_branch
    %23 = sbr.rel (0) target = $region17
  $region16: #{_forward_core.1} parent=0 // pred_region
    _
  $region17: #{_forward_core.1} parent=0 // pred_fallthru
    _
  // Predicated region
  $region18: #{_forward_core.1} parent=0 // pred_check
    _
  $region19: #{_forward_core.1} parent=0 // pred_check_branch
    %25 = sbr.rel (0) target = $region21
  $region20: #{_forward_core.1} parent=0 // pred_region
    _
  $region21: #{_forward_core.1} parent=0 // pred_fallthru
    _
  // Predicated region
  $region22: #{_forward_core.1} parent=0 // pred_check
    _
  $region23: #{_forward_core.1} parent=0 // pred_check_branch
    %27 = sbr.rel (0) target = $region25
  $region24: #{_forward_core.1} parent=0 // pred_region
    _
  $region25: #{_forward_core.1} parent=0 // pred_fallthru
    _
  // Predicated region
  $region26: #{_forward_core.1} parent=0 // pred_check
    _
  $region27: #{_forward_core.1} parent=0 // pred_check_branch
    %29 = sbr.rel (0) target = $region29
  $region28: #{_forward_core.1} parent=0 // pred_region
    _
  $region29: #{_forward_core.1} parent=0 // pred_fallthru
    _
  // Predicated region
  $region30: #{_forward_core.1} parent=0 // pred_check
    _
  $region31: #{_forward_core.1} parent=0 // pred_check_branch
    %31 = sbr.rel (0) target = $region33
  $region32: #{_forward_core.1} parent=0 // pred_region
    _
  $region33: #{_forward_core.1} parent=0 // pred_fallthru
    _
  // Predicated region
  $region34: #{_forward_core.1} parent=0 // pred_check
    _
  $region35: #{_forward_core.1} parent=0 // pred_check_branch
    %33 = sbr.rel (0) target = $region37
  $region36: #{_forward_core.1} parent=0 // pred_region
    _
  $region37: #{_forward_core.1} parent=0 // pred_fallthru
    _
  %v35 = vld [vmem:[%s0] sm:$0xff]
  %v36 = vld [vmem:[%s0 + $0x8] sm:$0xff]
  %v37 = vld [vmem:[%s1] sm:$0xf]
  %v38 = vld [vmem:[%s1 + $0x4] sm:$0xf]
  %v39 = vld [vmem:[%s1 + $0x8] sm:$0xf]
  %v40 = vld [vmem:[%s1 + $0xc] sm:$0xf]
  %v41 = vld [vmem:[%s1 + $0x10] sm:$0xf]
  %v42 = vld [vmem:[%s1 + $0x14] sm:$0xf]
  %v43 = vld [vmem:[%s1 + $0x18] sm:$0xf]
  %v44 = vld [vmem:[%s1 + $0x1c] sm:$0xf]
  %v45 = vld [vmem:[%s1 + $0x20] sm:$0xf]
  %v46 = vld [vmem:[%s1 + $0x24] sm:$0xf]
  %v47 = vld [vmem:[%s1 + $0x28] sm:$0xf]
  %v48 = vld [vmem:[%s1 + $0x2c] sm:$0xf]
  %v49 = vld [vmem:[%s1 + $0x30] sm:$0xf]
  %v50 = vld [vmem:[%s1 + $0x34] sm:$0xf]
  %v51 = vld [vmem:[%s1 + $0x38] sm:$0xf]
  %v52 = vld [vmem:[%s1 + $0x3c] sm:$0xf]
  %v53 = vld [vmem:[%s1 + $0x40] sm:$0xf]
  %v54 = vld [vmem:[%s1 + $0x44] sm:$0xf]
  %v55 = vld [vmem:[%s1 + $0x48] sm:$0xf]
  %v56 = vld [vmem:[%s1 + $0x4c] sm:$0xf]
  %v57 = vld [vmem:[%s1 + $0x50] sm:$0xf]
  %v58 = vld [vmem:[%s1 + $0x54] sm:$0xf]
  %v59 = vld [vmem:[%s1 + $0x58] sm:$0xf]
  %v60 = vld [vmem:[%s1 + $0x5c] sm:$0xf]
  %v63 = vunpack.c.l.b16 %v35
  %v64 = vunpack.c.h.b16 %v35
  %v65 = vunpack.c.l.b16 %v36
  %v66 = vunpack.c.h.b16 %v36
  %v67 = vpack.c.b16 %v65, %v63
  %v68 = vpack.c.b16 %v66, %v64
  %v94 = vunpack.c.l.b16 %v37
  %v95 = vunpack.c.l.b16 %v38
  %v96 = vunpack.c.l.b16 %v39
  %v97 = vunpack.c.l.b16 %v40
  %v98 = vunpack.c.l.b16 %v41
  %v99 = vunpack.c.l.b16 %v42
  %v100 = vunpack.c.l.b16 %v43
  %v101 = vunpack.c.l.b16 %v44
  %v102 = vunpack.c.l.b16 %v45
  %v103 = vunpack.c.l.b16 %v46
  %v104 = vunpack.c.l.b16 %v47
  %v105 = vunpack.c.l.b16 %v48
  %v106 = vunpack.c.l.b16 %v49
  %v107 = vunpack.c.l.b16 %v50
  %v108 = vunpack.c.l.b16 %v51
  %v109 = vunpack.c.l.b16 %v52
  %v110 = vunpack.c.l.b16 %v53
  %v111 = vunpack.c.l.b16 %v54
  %v112 = vunpack.c.l.b16 %v55
  %v113 = vunpack.c.l.b16 %v56
  %v114 = vunpack.c.l.b16 %v57
  %v115 = vunpack.c.l.b16 %v58
  %v116 = vunpack.c.l.b16 %v59
  %v117 = vunpack.c.l.b16 %v60
  %v118 = vpack.c.b16 %v95, %v94
  %v119 = vpack.c.b16 %v97, %v96
  %v120 = vpack.c.b16 %v99, %v98
  %v121 = vpack.c.b16 %v101, %v100
  %v122 = vpack.c.b16 %v103, %v102
  %v123 = vpack.c.b16 %v105, %v104
  %v124 = vpack.c.b16 %v107, %v106
  %v125 = vpack.c.b16 %v109, %v108
  %v126 = vpack.c.b16 %v111, %v110
  %v127 = vpack.c.b16 %v113, %v112
  %v128 = vpack.c.b16 %v115, %v114
  %v129 = vpack.c.b16 %v117, %v116
  %vm142 = vcmask 523264
  %v144 = vsel %vm142, %v68, 0
  %146 = vmatprep.subr.bf16.mxu0 0
  %147 = vmatpush1.bf16.msra.mxu0 %v118
  %148 = vmatprep.subr.bf16.mxu0 0
  %149 = vmatpush1.bf16.msra.mxu0 %v119
  %150 = vmatprep.subr.bf16.mxu0 0
  %151 = vmatpush1.bf16.msra.mxu0 %v120
  %152 = vmatprep.subr.bf16.mxu0 0
  %153 = vmatpush1.bf16.msra.mxu0 %v121
  %154 = vmatprep.subr.bf16.mxu0 0
  %155 = vmatpush1.bf16.msra.mxu0 %v122
  %156 = vmatprep.subr.bf16.mxu0 0
  %157 = vmatpush1.bf16.msra.mxu0 %v123
  %158 = vmatprep.subr.bf16.mxu0 0
  %159 = vmatpush1.bf16.msra.mxu0 %v124
  %160 = vmatprep.subr.bf16.mxu0 0
  %161 = vmatpush1.bf16.msra.mxu0 %v125
  %162 = vmatprep.subr.bf16.mxu0 0
  %163 = vmatpush1.bf16.msra.mxu0 %v126
  %164 = vmatprep.subr.bf16.mxu0 0
  %165 = vmatpush1.bf16.msra.mxu0 %v127
  %166 = vmatprep.subr.bf16.mxu0 0
  %167 = vmatpush1.bf16.msra.mxu0 %v128
  %168 = vmatprep.subr.bf16.mxu0 0
  %169 = vmatpush1.bf16.msra.mxu0 %v129
  %170 = vmatprep.subr.bf16.mxu0 0
  %171 = vmatpush1.bf16.msra.mxu0 0
  %172 = vmatprep.subr.bf16.mxu0 0
  %173 = vmatpush1.bf16.msra.mxu0 0
  %174 = vmatprep.subr.bf16.mxu0 0
  %175 = vmatpush1.bf16.msra.mxu0 0
  %176 = vmatprep.subr.bf16.mxu0 0
  %177 = vmatpush1.bf16.msra.mxu0 0
  %178 = vmatprep.mubr.bf16.mxu0 %v144
  %179 = vmatmul.mubr.bf16.gmra.mrb[0].mxu0 %v67
  %v180 = vpop.f32.mrb[0].mxu0
  %v181 = vadd.f32 0.0, %v180
  %v182 = vpop.f32.mrb[0].mxu0
  %v183 = vpop.f32.mrb[0].mxu0
  %v184 = vadd.f32 0.0, %v183
  %v185 = vpop.f32.mrb[0].mxu0
  %186 = vdwg.mxu0
  %v187 = vsel %vm142, %v181, 0.0
  %188 = vadd.xlane.f32.xlu0 %v187
  %v189 = vpop.xlane.xlu0 %188
  %v190 = vsel %vm142, %v184, 0.0
  %191 = vadd.xlane.f32.xlu0 %v190
  %v192 = vpop.xlane.xlu0 %191
  %v193 = vrcp.pop 64.0
  %v194 = vmul.f32 %v189, %v193
  %v195 = vmul.f32 %v192, %v193
  %v196 = vsub.f32 %v181, %v194
  %v197 = vsub.f32 %v184, %v195
  %v198 = vmul.f32 %v196, %v196
  %v199 = vmul.f32 %v197, %v197
  %v200 = vsel %vm142, %v198, 0.0
  %201 = vadd.xlane.f32.xlu0 %v200
  %v202 = vpop.xlane.xlu0 %201
  %v203 = vsel %vm142, %v199, 0.0
  %204 = vadd.xlane.f32.xlu0 %v203
  %v205 = vpop.xlane.xlu0 %204
  %v206 = vmul.f32 %v202, %v193
  %v207 = vmul.f32 %v205, %v193
  %v208 = vadd.f32 %v206, 1e-05
  %v209 = vadd.f32 %v207, 1e-05
  %v210 = vrsqrt.pop %v208
  %v211 = vrsqrt.pop %v209
  %v212 = vmul.f32 %v196, %v210
  %v213 = vmul.f32 %v197, %v211
  %v214 = vld [vmem:[%s2] sm:$0x1]
  %v216 = vlaneseq
  %v217 = vshrl.u32 %v216, 7
  %v218 = vsub.s32 0, %v217
  %v219 = vrot.slane %v214, %v218
  %v221 = vmul.f32 %v212, %v219
  %v222 = vmul.f32 %v213, %v219
  %v223 = vld [vmem:[%s3] sm:$0x1]
  %v225 = vlaneseq
  %v226 = vshrl.u32 %v225, 7
  %v227 = vsub.s32 0, %v226
  %v228 = vrot.slane %v223, %v227
  %v230 = vadd.f32 %v221, %v228
  %v231 = vadd.f32 %v222, %v228
  %v232 = vpack.c.bf16 %v231, %v230
  %v233 = vld [vmem:[%s4] sm:$0xff]
  %v234 = vld [vmem:[%s4 + $0x8] sm:$0xff]
  %v235 = vld [vmem:[%s4 + $0x10] sm:$0xff]
  %v236 = vld [vmem:[%s4 + $0x18] sm:$0xff]
  %v237 = vld [vmem:[%s4 + $0x20] sm:$0xff]
  %v238 = vld [vmem:[%s4 + $0x28] sm:$0xff]
  %v239 = vld [vmem:[%s4 + $0x30] sm:$0xff]
  %v240 = vld [vmem:[%s4 + $0x38] sm:$0xff]
  %v241 = vld [vmem:[%s4 + $0x40] sm:$0xff]
  %v242 = vld [vmem:[%s4 + $0x48] sm:$0xff]
  %v243 = vld [vmem:[%s4 + $0x50] sm:$0xff]
  %v244 = vld [vmem:[%s4 + $0x58] sm:$0xff]
  %v245 = vld [vmem:[%s4 + $0x60] sm:$0xff]
  %v246 = vld [vmem:[%s4 + $0x68] sm:$0xff]
  %v247 = vld [vmem:[%s4 + $0x70] sm:$0xff]
  %v248 = vld [vmem:[%s4 + $0x78] sm:$0xff]
  %v265 = vunpack.c.l.b16 %v233
  %v266 = vunpack.c.h.b16 %v233
  %v267 = vunpack.c.l.b16 %v234
  %v268 = vunpack.c.h.b16 %v234
  %v269 = vunpack.c.l.b16 %v235
  %v270 = vunpack.c.h.b16 %v235
  %v271 = vunpack.c.l.b16 %v236
  %v272 = vunpack.c.h.b16 %v236
  %v273 = vunpack.c.l.b16 %v237
  %v274 = vunpack.c.h.b16 %v237
  %v275 = vunpack.c.l.b16 %v238
  %v276 = vunpack.c.h.b16 %v238
  %v277 = vunpack.c.l.b16 %v239
  %v278 = vunpack.c.h.b16 %v239
  %v279 = vunpack.c.l.b16 %v240
  %v280 = vunpack.c.h.b16 %v240
  %v281 = vunpack.c.l.b16 %v241
  %v282 = vunpack.c.h.b16 %v241
  %v283 = vunpack.c.l.b16 %v242
  %v284 = vunpack.c.h.b16 %v242
  %v285 = vunpack.c.l.b16 %v243
  %v286 = vunpack.c.h.b16 %v243
  %v287 = vunpack.c.l.b16 %v244
  %v288 = vunpack.c.h.b16 %v244
  %v289 = vunpack.c.l.b16 %v245
  %v290 = vunpack.c.h.b16 %v245
  %v291 = vunpack.c.l.b16 %v246
  %v292 = vunpack.c.h.b16 %v246
  %v293 = vunpack.c.l.b16 %v247
  %v294 = vunpack.c.h.b16 %v247
  %v295 = vunpack.c.l.b16 %v248
  %v296 = vunpack.c.h.b16 %v248
  %v297 = vpack.c.b16 %v269, %v265
  %v298 = vpack.c.b16 %v270, %v266
  %v299 = vpack.c.b16 %v271, %v267
  %v300 = vpack.c.b16 %v272, %v268
  %v301 = vpack.c.b16 %v277, %v273
  %v302 = vpack.c.b16 %v278, %v274
  %v303 = vpack.c.b16 %v279, %v275
  %v304 = vpack.c.b16 %v280, %v276
  %v305 = vpack.c.b16 %v285, %v281
  %v306 = vpack.c.b16 %v286, %v282
  %v307 = vpack.c.b16 %v287, %v283
  %v308 = vpack.c.b16 %v288, %v284
  %v309 = vpack.c.b16 %v293, %v289
  %v310 = vpack.c.b16 %v294, %v290
  %v311 = vpack.c.b16 %v295, %v291
  %v312 = vpack.c.b16 %v296, %v292
  %v330 = vsel %vm142, %v232, 0
  %332 = vmatprep.subr.bf16.mxu0 %v298
  %333 = vmatpush1.bf16.msra.mxu0 %v297
  %334 = vmatprep.subr.bf16.mxu0 %v302
  %335 = vmatpush1.bf16.msra.mxu0 %v301
  %336 = vmatprep.subr.bf16.mxu0 %v306
  %337 = vmatpush1.bf16.msra.mxu0 %v305
  %338 = vmatprep.subr.bf16.mxu0 %v310
  %339 = vmatpush1.bf16.msra.mxu0 %v309
  %340 = vmatprep.subr.bf16.mxu0 0
  %341 = vmatpush1.bf16.msra.mxu0 0
  %342 = vmatprep.subr.bf16.mxu0 0
  %343 = vmatpush1.bf16.msra.mxu0 0
  %344 = vmatprep.subr.bf16.mxu0 0
  %345 = vmatpush1.bf16.msra.mxu0 0
  %346 = vmatprep.subr.bf16.mxu0 0
  %347 = vmatpush1.bf16.msra.mxu0 0
  %348 = vmatprep.subr.bf16.mxu0 0
  %349 = vmatpush1.bf16.msra.mxu0 0
  %350 = vmatprep.subr.bf16.mxu0 0
  %351 = vmatpush1.bf16.msra.mxu0 0
  %352 = vmatprep.subr.bf16.mxu0 0
  %353 = vmatpush1.bf16.msra.mxu0 0
  %354 = vmatprep.subr.bf16.mxu0 0
  %355 = vmatpush1.bf16.msra.mxu0 0
  %356 = vmatprep.subr.bf16.mxu0 0
  %357 = vmatpush1.bf16.msra.mxu0 0
  %358 = vmatprep.subr.bf16.mxu0 0
  %359 = vmatpush1.bf16.msra.mxu0 0
  %360 = vmatprep.subr.bf16.mxu0 0
  %361 = vmatpush1.bf16.msra.mxu0 0
  %362 = vmatprep.subr.bf16.mxu0 0
  %363 = vmatpush1.bf16.msra.mxu0 0
  %364 = vmatprep.mubr.bf16.mxu0 0
  %365 = vmatmul.mubr.bf16.gmra.mrb[0].mxu0 %v330
  %v366 = vpop.f32.mrb[0].mxu0
  %v367 = vadd.f32 0.0, %v366
  %v368 = vpop.f32.mrb[0].mxu0
  %v369 = vadd.f32 0.0, %v368
  %v370 = vpop.f32.mrb[0].mxu0
  %v371 = vadd.f32 0.0, %v370
  %v372 = vpop.f32.mrb[0].mxu0
  %v373 = vadd.f32 0.0, %v372
  %374 = vdwg.mxu0
  %375 = vmatprep.subr.bf16.mxu0 %v300
  %376 = vmatpush1.bf16.msra.mxu0 %v299
  %377 = vmatprep.subr.bf16.mxu0 %v304
  %378 = vmatpush1.bf16.msra.mxu0 %v303
  %379 = vmatprep.subr.bf16.mxu0 %v308
  %380 = vmatpush1.bf16.msra.mxu0 %v307
  %381 = vmatprep.subr.bf16.mxu0 %v312
  %382 = vmatpush1.bf16.msra.mxu0 %v311
  %383 = vmatprep.subr.bf16.mxu0 0
  %384 = vmatpush1.bf16.msra.mxu0 0
  %385 = vmatprep.subr.bf16.mxu0 0
  %386 = vmatpush1.bf16.msra.mxu0 0
  %387 = vmatprep.subr.bf16.mxu0 0
  %388 = vmatpush1.bf16.msra.mxu0 0
  %389 = vmatprep.subr.bf16.mxu0 0
  %390 = vmatpush1.bf16.msra.mxu0 0
  %391 = vmatprep.subr.bf16.mxu0 0
  %392 = vmatpush1.bf16.msra.mxu0 0
  %393 = vmatprep.subr.bf16.mxu0 0
  %394 = vmatpush1.bf16.msra.mxu0 0
  %395 = vmatprep.subr.bf16.mxu0 0
  %396 = vmatpush1.bf16.msra.mxu0 0
  %397 = vmatprep.subr.bf16.mxu0 0
  %398 = vmatpush1.bf16.msra.mxu0 0
  %399 = vmatprep.subr.bf16.mxu0 0
  %400 = vmatpush1.bf16.msra.mxu0 0
  %401 = vmatprep.subr.bf16.mxu0 0
  %402 = vmatpush1.bf16.msra.mxu0 0
  %403 = vmatprep.subr.bf16.mxu0 0
  %404 = vmatpush1.bf16.msra.mxu0 0
  %405 = vmatprep.subr.bf16.mxu0 0
  %406 = vmatpush1.bf16.msra.mxu0 0
  %407 = vmatprep.mubr.bf16.mxu0 0
  %408 = vmatmul.mubr.bf16.gmra.mrb[0].mxu0 %v330
  %v409 = vpop.f32.mrb[0].mxu0
  %v410 = vadd.f32 0.0, %v409
  %v411 = vpop.f32.mrb[0].mxu0
  %v412 = vadd.f32 0.0, %v411
  %v413 = vpop.f32.mrb[0].mxu0
  %v414 = vadd.f32 0.0, %v413
  %v415 = vpop.f32.mrb[0].mxu0
  %v416 = vadd.f32 0.0, %v415
  %417 = vdwg.mxu0
  %418 = vst [vmem:[%s9] sm:$0xff] %v367
  %419 = vst [vmem:[%s9 + $0x8] sm:$0xff] %v369
  %420 = vst [vmem:[%s9 + $0x10] sm:$0xff] %v410
  %421 = vst [vmem:[%s9 + $0x18] sm:$0xff] %v412
  %422 = vst [vmem:[%s9 + $0x20] sm:$0xff] %v371
  %423 = vst [vmem:[%s9 + $0x28] sm:$0xff] %v373
  %424 = vst [vmem:[%s9 + $0x30] sm:$0xff] %v414
  %425 = vst [vmem:[%s9 + $0x38] sm:$0xff] %v416
  %v426 = vld [vmem:[%s5] sm:$0xff]
  %v427 = vld [vmem:[%s5 + $0x8] sm:$0xff]
  %v428 = vld [vmem:[%s5 + $0x10] sm:$0xff]
  %v429 = vld [vmem:[%s5 + $0x18] sm:$0xff]
  %v430 = vadd.f32 %v426, %v427
  %v431 = vadd.f32 %v430, %v428
  %v432 = vadd.f32 %v431, %v429
  %433 = vadd.xlane.f32.xlu0 %v432
  %v434 = vpop.xlane.xlu0 %433
  %v435 = vrcp.pop 512.0
  %v436 = vmul.f32 %v434, %v435
  %v437 = vsub.f32 %v426, %v436
  %v438 = vsub.f32 %v427, %v436
  %v439 = vsub.f32 %v428, %v436
  %v440 = vsub.f32 %v429, %v436
  %v441 = vmul.f32 %v437, %v437
  %v442 = vmul.f32 %v438, %v438
  %v443 = vmul.f32 %v439, %v439
  %v444 = vmul.f32 %v440, %v440
  %v445 = vadd.f32 %v441, %v442
  %v446 = vadd.f32 %v445, %v443
  %v447 = vadd.f32 %v446, %v444
  %448 = vadd.xlane.f32.xlu0 %v447
  %v449 = vpop.xlane.xlu0 %448
  %v450 = vmul.f32 %v449, %v435
  %v451 = vadd.f32 %v450, 1e-05
  %v452 = vrsqrt.pop %v451
  %v453 = vmul.f32 %v437, %v452
  %v454 = vmul.f32 %v438, %v452
  %v455 = vmul.f32 %v439, %v452
  %v456 = vmul.f32 %v440, %v452
  %v457 = vld [vmem:[%s6] sm:$0xf]
  %v459 = vlaneseq
  %v460 = vshrl.u32 %v459, 7
  %v461 = vsub.s32 0, %v460
  %v462 = vrot.slane %v457, %v461
  %v463 = vlaneseq
  %v464 = vshrl.u32 %v463, 7
  %v465 = vsub.s32 1, %v464
  %v466 = vrot.slane %v457, %v465
  %v467 = vlaneseq
  %v468 = vshrl.u32 %v467, 7
  %v469 = vsub.s32 2, %v468
  %v470 = vrot.slane %v457, %v469
  %v471 = vlaneseq
  %v472 = vshrl.u32 %v471, 7
  %v473 = vsub.s32 3, %v472
  %v474 = vrot.slane %v457, %v473
  %v479 = vmul.f32 %v453, %v462
  %v480 = vmul.f32 %v454, %v466
  %v481 = vmul.f32 %v455, %v470
  %v482 = vmul.f32 %v456, %v474
  %v483 = vld [vmem:[%s7] sm:$0xf]
  %v485 = vlaneseq
  %v486 = vshrl.u32 %v485, 7
  %v487 = vsub.s32 0, %v486
  %v488 = vrot.slane %v483, %v487
  %v489 = vlaneseq
  %v490 = vshrl.u32 %v489, 7
  %v491 = vsub.s32 1, %v490
  %v492 = vrot.slane %v483, %v491
  %v493 = vlaneseq
  %v494 = vshrl.u32 %v493, 7
  %v495 = vsub.s32 2, %v494
  %v496 = vrot.slane %v483, %v495
  %v497 = vlaneseq
  %v498 = vshrl.u32 %v497, 7
  %v499 = vsub.s32 3, %v498
  %v500 = vrot.slane %v483, %v499
  %v505 = vadd.f32 %v479, %v488
  %v506 = vadd.f32 %v480, %v492
  %v507 = vadd.f32 %v481, %v496
  %v508 = vadd.f32 %v482, %v500
  %v509 = vpack.c.bf16 %v505, %v505
  %v510 = vpack.c.bf16 %v506, %v506
  %v511 = vpack.c.bf16 %v507, %v507
  %v512 = vpack.c.bf16 %v508, %v508
  %v513 = vld [vmem:[%s8] sm:$0xff]
  %v514 = vld [vmem:[%s8 + $0x8] sm:$0xff]
  %v515 = vld [vmem:[%s8 + $0x10] sm:$0xff]
  %v516 = vld [vmem:[%s8 + $0x18] sm:$0xff]
  %v517 = vld [vmem:[%s8 + $0x20] sm:$0xff]
  %v518 = vld [vmem:[%s8 + $0x28] sm:$0xff]
  %v519 = vld [vmem:[%s8 + $0x30] sm:$0xff]
  %v520 = vld [vmem:[%s8 + $0x38] sm:$0xff]
  %v521 = vld [vmem:[%s8 + $0x40] sm:$0xff]
  %v522 = vld [vmem:[%s8 + $0x48] sm:$0xff]
  %v523 = vld [vmem:[%s8 + $0x50] sm:$0xff]
  %v524 = vld [vmem:[%s8 + $0x58] sm:$0xff]
  %v525 = vld [vmem:[%s8 + $0x60] sm:$0xff]
  %v526 = vld [vmem:[%s8 + $0x68] sm:$0xff]
  %v527 = vld [vmem:[%s8 + $0x70] sm:$0xff]
  %v528 = vld [vmem:[%s8 + $0x78] sm:$0xff]
  %v529 = vld [vmem:[%s8 + $0x80] sm:$0xff]
  %v530 = vld [vmem:[%s8 + $0x88] sm:$0xff]
  %v531 = vld [vmem:[%s8 + $0x90] sm:$0xff]
  %v532 = vld [vmem:[%s8 + $0x98] sm:$0xff]
  %v533 = vld [vmem:[%s8 + $0xa0] sm:$0xff]
  %v534 = vld [vmem:[%s8 + $0xa8] sm:$0xff]
  %v535 = vld [vmem:[%s8 + $0xb0] sm:$0xff]
  %v536 = vld [vmem:[%s8 + $0xb8] sm:$0xff]
  %v537 = vld [vmem:[%s8 + $0xc0] sm:$0xff]
  %v538 = vld [vmem:[%s8 + $0xc8] sm:$0xff]
  %v539 = vld [vmem:[%s8 + $0xd0] sm:$0xff]
  %v540 = vld [vmem:[%s8 + $0xd8] sm:$0xff]
  %v541 = vld [vmem:[%s8 + $0xe0] sm:$0xff]
  %v542 = vld [vmem:[%s8 + $0xe8] sm:$0xff]
  %v543 = vld [vmem:[%s8 + $0xf0] sm:$0xff]
  %v544 = vld [vmem:[%s8 + $0xf8] sm:$0xff]
  %v545 = vld [vmem:[%s8 + $0x100] sm:$0xff]
  %v546 = vld [vmem:[%s8 + $0x108] sm:$0xff]
  %v547 = vld [vmem:[%s8 + $0x110] sm:$0xff]
  %v548 = vld [vmem:[%s8 + $0x118] sm:$0xff]
  %v549 = vld [vmem:[%s8 + $0x120] sm:$0xff]
  %v550 = vld [vmem:[%s8 + $0x128] sm:$0xff]
  %v551 = vld [vmem:[%s8 + $0x130] sm:$0xff]
  %v552 = vld [vmem:[%s8 + $0x138] sm:$0xff]
  %v553 = vld [vmem:[%s8 + $0x140] sm:$0xff]
  %v554 = vld [vmem:[%s8 + $0x148] sm:$0xff]
  %v555 = vld [vmem:[%s8 + $0x150] sm:$0xff]
  %v556 = vld [vmem:[%s8 + $0x158] sm:$0xff]
  %v557 = vld [vmem:[%s8 + $0x160] sm:$0xff]
  %v558 = vld [vmem:[%s8 + $0x168] sm:$0xff]
  %v559 = vld [vmem:[%s8 + $0x170] sm:$0xff]
  %v560 = vld [vmem:[%s8 + $0x178] sm:$0xff]
  %v561 = vld [vmem:[%s8 + $0x180] sm:$0xff]
  %v562 = vld [vmem:[%s8 + $0x188] sm:$0xff]
  %v563 = vld [vmem:[%s8 + $0x190] sm:$0xff]
  %v564 = vld [vmem:[%s8 + $0x198] sm:$0xff]
  %v565 = vld [vmem:[%s8 + $0x1a0] sm:$0xff]
  %v566 = vld [vmem:[%s8 + $0x1a8] sm:$0xff]
  %v567 = vld [vmem:[%s8 + $0x1b0] sm:$0xff]
  %v568 = vld [vmem:[%s8 + $0x1b8] sm:$0xff]
  %v569 = vld [vmem:[%s8 + $0x1c0] sm:$0xff]
  %v570 = vld [vmem:[%s8 + $0x1c8] sm:$0xff]
  %v571 = vld [vmem:[%s8 + $0x1d0] sm:$0xff]
  %v572 = vld [vmem:[%s8 + $0x1d8] sm:$0xff]
  %v573 = vld [vmem:[%s8 + $0x1e0] sm:$0xff]
  %v574 = vld [vmem:[%s8 + $0x1e8] sm:$0xff]
  %v575 = vld [vmem:[%s8 + $0x1f0] sm:$0xff]
  %v576 = vld [vmem:[%s8 + $0x1f8] sm:$0xff]
  %v577 = vld [vmem:[%s8 + $0x200] sm:$0xff]
  %v578 = vld [vmem:[%s8 + $0x208] sm:$0xff]
  %v579 = vld [vmem:[%s8 + $0x210] sm:$0xff]
  %v580 = vld [vmem:[%s8 + $0x218] sm:$0xff]
  %v581 = vld [vmem:[%s8 + $0x220] sm:$0xff]
  %v582 = vld [vmem:[%s8 + $0x228] sm:$0xff]
  %v583 = vld [vmem:[%s8 + $0x230] sm:$0xff]
  %v584 = vld [vmem:[%s8 + $0x238] sm:$0xff]
  %v585 = vld [vmem:[%s8 + $0x240] sm:$0xff]
  %v586 = vld [vmem:[%s8 + $0x248] sm:$0xff]
  %v587 = vld [vmem:[%s8 + $0x250] sm:$0xff]
  %v588 = vld [vmem:[%s8 + $0x258] sm:$0xff]
  %v589 = vld [vmem:[%s8 + $0x260] sm:$0xff]
  %v590 = vld [vmem:[%s8 + $0x268] sm:$0xff]
  %v591 = vld [vmem:[%s8 + $0x270] sm:$0xff]
  %v592 = vld [vmem:[%s8 + $0x278] sm:$0xff]
  %v593 = vld [vmem:[%s8 + $0x280] sm:$0xff]
  %v594 = vld [vmem:[%s8 + $0x288] sm:$0xff]
  %v595 = vld [vmem:[%s8 + $0x290] sm:$0xff]
  %v596 = vld [vmem:[%s8 + $0x298] sm:$0xff]
  %v597 = vld [vmem:[%s8 + $0x2a0] sm:$0xff]
  %v598 = vld [vmem:[%s8 + $0x2a8] sm:$0xff]
  %v599 = vld [vmem:[%s8 + $0x2b0] sm:$0xff]
  %v600 = vld [vmem:[%s8 + $0x2b8] sm:$0xff]
  %v601 = vld [vmem:[%s8 + $0x2c0] sm:$0xff]
  %v602 = vld [vmem:[%s8 + $0x2c8] sm:$0xff]
  %v603 = vld [vmem:[%s8 + $0x2d0] sm:$0xff]
  %v604 = vld [vmem:[%s8 + $0x2d8] sm:$0xff]
  %v605 = vld [vmem:[%s8 + $0x2e0] sm:$0xff]
  %v606 = vld [vmem:[%s8 + $0x2e8] sm:$0xff]
  %v607 = vld [vmem:[%s8 + $0x2f0] sm:$0xff]
  %v608 = vld [vmem:[%s8 + $0x2f8] sm:$0xff]
  %v609 = vld [vmem:[%s8 + $0x300] sm:$0xff]
  %v610 = vld [vmem:[%s8 + $0x308] sm:$0xff]
  %v611 = vld [vmem:[%s8 + $0x310] sm:$0xff]
  %v612 = vld [vmem:[%s8 + $0x318] sm:$0xff]
  %v613 = vld [vmem:[%s8 + $0x320] sm:$0xff]
  %v614 = vld [vmem:[%s8 + $0x328] sm:$0xff]
  %v615 = vld [vmem:[%s8 + $0x330] sm:$0xff]
  %v616 = vld [vmem:[%s8 + $0x338] sm:$0xff]
  %v617 = vld [vmem:[%s8 + $0x340] sm:$0xff]
  %v618 = vld [vmem:[%s8 + $0x348] sm:$0xff]
  %v619 = vld [vmem:[%s8 + $0x350] sm:$0xff]
  %v620 = vld [vmem:[%s8 + $0x358] sm:$0xff]
  %v621 = vld [vmem:[%s8 + $0x360] sm:$0xff]
  %v622 = vld [vmem:[%s8 + $0x368] sm:$0xff]
  %v623 = vld [vmem:[%s8 + $0x370] sm:$0xff]
  %v624 = vld [vmem:[%s8 + $0x378] sm:$0xff]
  %v625 = vld [vmem:[%s8 + $0x380] sm:$0xff]
  %v626 = vld [vmem:[%s8 + $0x388] sm:$0xff]
  %v627 = vld [vmem:[%s8 + $0x390] sm:$0xff]
  %v628 = vld [vmem:[%s8 + $0x398] sm:$0xff]
  %v629 = vld [vmem:[%s8 + $0x3a0] sm:$0xff]
  %v630 = vld [vmem:[%s8 + $0x3a8] sm:$0xff]
  %v631 = vld [vmem:[%s8 + $0x3b0] sm:$0xff]
  %v632 = vld [vmem:[%s8 + $0x3b8] sm:$0xff]
  %v633 = vld [vmem:[%s8 + $0x3c0] sm:$0xff]
  %v634 = vld [vmem:[%s8 + $0x3c8] sm:$0xff]
  %v635 = vld [vmem:[%s8 + $0x3d0] sm:$0xff]
  %v636 = vld [vmem:[%s8 + $0x3d8] sm:$0xff]
  %v637 = vld [vmem:[%s8 + $0x3e0] sm:$0xff]
  %v638 = vld [vmem:[%s8 + $0x3e8] sm:$0xff]
  %v639 = vld [vmem:[%s8 + $0x3f0] sm:$0xff]
  %v640 = vld [vmem:[%s8 + $0x3f8] sm:$0xff]
  %v769 = vunpack.c.l.b16 %v513
  %v770 = vunpack.c.h.b16 %v513
  %v771 = vunpack.c.l.b16 %v514
  %v772 = vunpack.c.h.b16 %v514
  %v773 = vunpack.c.l.b16 %v515
  %v774 = vunpack.c.h.b16 %v515
  %v775 = vunpack.c.l.b16 %v516
  %v776 = vunpack.c.h.b16 %v516
  %v777 = vunpack.c.l.b16 %v517
  %v778 = vunpack.c.h.b16 %v517
  %v779 = vunpack.c.l.b16 %v518
  %v780 = vunpack.c.h.b16 %v518
  %v781 = vunpack.c.l.b16 %v519
  %v782 = vunpack.c.h.b16 %v519
  %v783 = vunpack.c.l.b16 %v520
  %v784 = vunpack.c.h.b16 %v520
  %v785 = vunpack.c.l.b16 %v521
  %v786 = vunpack.c.h.b16 %v521
  %v787 = vunpack.c.l.b16 %v522
  %v788 = vunpack.c.h.b16 %v522
  %v789 = vunpack.c.l.b16 %v523
  %v790 = vunpack.c.h.b16 %v523
  %v791 = vunpack.c.l.b16 %v524
  %v792 = vunpack.c.h.b16 %v524
  %v793 = vunpack.c.l.b16 %v525
  %v794 = vunpack.c.h.b16 %v525
  %v795 = vunpack.c.l.b16 %v526
  %v796 = vunpack.c.h.b16 %v526
  %v797 = vunpack.c.l.b16 %v527
  %v798 = vunpack.c.h.b16 %v527
  %v799 = vunpack.c.l.b16 %v528
  %v800 = vunpack.c.h.b16 %v528
  %v801 = vunpack.c.l.b16 %v529
  %v802 = vunpack.c.h.b16 %v529
  %v803 = vunpack.c.l.b16 %v530
  %v804 = vunpack.c.h.b16 %v530
  %v805 = vunpack.c.l.b16 %v531
  %v806 = vunpack.c.h.b16 %v531
  %v807 = vunpack.c.l.b16 %v532
  %v808 = vunpack.c.h.b16 %v532
  %v809 = vunpack.c.l.b16 %v533
  %v810 = vunpack.c.h.b16 %v533
  %v811 = vunpack.c.l.b16 %v534
  %v812 = vunpack.c.h.b16 %v534
  %v813 = vunpack.c.l.b16 %v535
  %v814 = vunpack.c.h.b16 %v535
  %v815 = vunpack.c.l.b16 %v536
  %v816 = vunpack.c.h.b16 %v536
  %v817 = vunpack.c.l.b16 %v537
  %v818 = vunpack.c.h.b16 %v537
  %v819 = vunpack.c.l.b16 %v538
  %v820 = vunpack.c.h.b16 %v538
  %v821 = vunpack.c.l.b16 %v539
  %v822 = vunpack.c.h.b16 %v539
  %v823 = vunpack.c.l.b16 %v540
  %v824 = vunpack.c.h.b16 %v540
  %v825 = vunpack.c.l.b16 %v541
  %v826 = vunpack.c.h.b16 %v541
  %v827 = vunpack.c.l.b16 %v542
  %v828 = vunpack.c.h.b16 %v542
  %v829 = vunpack.c.l.b16 %v543
  %v830 = vunpack.c.h.b16 %v543
  %v831 = vunpack.c.l.b16 %v544
  %v832 = vunpack.c.h.b16 %v544
  %v833 = vunpack.c.l.b16 %v545
  %v834 = vunpack.c.h.b16 %v545
  %v835 = vunpack.c.l.b16 %v546
  %v836 = vunpack.c.h.b16 %v546
  %v837 = vunpack.c.l.b16 %v547
  %v838 = vunpack.c.h.b16 %v547
  %v839 = vunpack.c.l.b16 %v548
  %v840 = vunpack.c.h.b16 %v548
  %v841 = vunpack.c.l.b16 %v549
  %v842 = vunpack.c.h.b16 %v549
  %v843 = vunpack.c.l.b16 %v550
  %v844 = vunpack.c.h.b16 %v550
  %v845 = vunpack.c.l.b16 %v551
  %v846 = vunpack.c.h.b16 %v551
  %v847 = vunpack.c.l.b16 %v552
  %v848 = vunpack.c.h.b16 %v552
  %v849 = vunpack.c.l.b16 %v553
  %v850 = vunpack.c.h.b16 %v553
  %v851 = vunpack.c.l.b16 %v554
  %v852 = vunpack.c.h.b16 %v554
  %v853 = vunpack.c.l.b16 %v555
  %v854 = vunpack.c.h.b16 %v555
  %v855 = vunpack.c.l.b16 %v556
  %v856 = vunpack.c.h.b16 %v556
  %v857 = vunpack.c.l.b16 %v557
  %v858 = vunpack.c.h.b16 %v557
  %v859 = vunpack.c.l.b16 %v558
  %v860 = vunpack.c.h.b16 %v558
  %v861 = vunpack.c.l.b16 %v559
  %v862 = vunpack.c.h.b16 %v559
  %v863 = vunpack.c.l.b16 %v560
  %v864 = vunpack.c.h.b16 %v560
  %v865 = vunpack.c.l.b16 %v561
  %v866 = vunpack.c.h.b16 %v561
  %v867 = vunpack.c.l.b16 %v562
  %v868 = vunpack.c.h.b16 %v562
  %v869 = vunpack.c.l.b16 %v563
  %v870 = vunpack.c.h.b16 %v563
  %v871 = vunpack.c.l.b16 %v564
  %v872 = vunpack.c.h.b16 %v564
  %v873 = vunpack.c.l.b16 %v565
  %v874 = vunpack.c.h.b16 %v565
  %v875 = vunpack.c.l.b16 %v566
  %v876 = vunpack.c.h.b16 %v566
  %v877 = vunpack.c.l.b16 %v567
  %v878 = vunpack.c.h.b16 %v567
  %v879 = vunpack.c.l.b16 %v568
  %v880 = vunpack.c.h.b16 %v568
  %v881 = vunpack.c.l.b16 %v569
  %v882 = vunpack.c.h.b16 %v569
  %v883 = vunpack.c.l.b16 %v570
  %v884 = vunpack.c.h.b16 %v570
  %v885 = vunpack.c.l.b16 %v571
  %v886 = vunpack.c.h.b16 %v571
  %v887 = vunpack.c.l.b16 %v572
  %v888 = vunpack.c.h.b16 %v572
  %v889 = vunpack.c.l.b16 %v573
  %v890 = vunpack.c.h.b16 %v573
  %v891 = vunpack.c.l.b16 %v574
  %v892 = vunpack.c.h.b16 %v574
  %v893 = vunpack.c.l.b16 %v575
  %v894 = vunpack.c.h.b16 %v575
  %v895 = vunpack.c.l.b16 %v576
  %v896 = vunpack.c.h.b16 %v576
  %v897 = vunpack.c.l.b16 %v577
  %v898 = vunpack.c.h.b16 %v577
  %v899 = vunpack.c.l.b16 %v578
  %v900 = vunpack.c.h.b16 %v578
  %v901 = vunpack.c.l.b16 %v579
  %v902 = vunpack.c.h.b16 %v579
  %v903 = vunpack.c.l.b16 %v580
  %v904 = vunpack.c.h.b16 %v580
  %v905 = vunpack.c.l.b16 %v581
  %v906 = vunpack.c.h.b16 %v581
  %v907 = vunpack.c.l.b16 %v582
  %v908 = vunpack.c.h.b16 %v582
  %v909 = vunpack.c.l.b16 %v583
  %v910 = vunpack.c.h.b16 %v583
  %v911 = vunpack.c.l.b16 %v584
  %v912 = vunpack.c.h.b16 %v584
  %v913 = vunpack.c.l.b16 %v585
  %v914 = vunpack.c.h.b16 %v585
  %v915 = vunpack.c.l.b16 %v586
  %v916 = vunpack.c.h.b16 %v586
  %v917 = vunpack.c.l.b16 %v587
  %v918 = vunpack.c.h.b16 %v587
  %v919 = vunpack.c.l.b16 %v588
  %v920 = vunpack.c.h.b16 %v588
  %v921 = vunpack.c.l.b16 %v589
  %v922 = vunpack.c.h.b16 %v589
  %v923 = vunpack.c.l.b16 %v590
  %v924 = vunpack.c.h.b16 %v590
  %v925 = vunpack.c.l.b16 %v591
  %v926 = vunpack.c.h.b16 %v591
  %v927 = vunpack.c.l.b16 %v592
  %v928 = vunpack.c.h.b16 %v592
  %v929 = vunpack.c.l.b16 %v593
  %v930 = vunpack.c.h.b16 %v593
  %v931 = vunpack.c.l.b16 %v594
  %v932 = vunpack.c.h.b16 %v594
  %v933 = vunpack.c.l.b16 %v595
  %v934 = vunpack.c.h.b16 %v595
  %v935 = vunpack.c.l.b16 %v596
  %v936 = vunpack.c.h.b16 %v596
  %v937 = vunpack.c.l.b16 %v597
  %v938 = vunpack.c.h.b16 %v597
  %v939 = vunpack.c.l.b16 %v598
  %v940 = vunpack.c.h.b16 %v598
  %v941 = vunpack.c.l.b16 %v599
  %v942 = vunpack.c.h.b16 %v599
  %v943 = vunpack.c.l.b16 %v600
  %v944 = vunpack.c.h.b16 %v600
  %v945 = vunpack.c.l.b16 %v601
  %v946 = vunpack.c.h.b16 %v601
  %v947 = vunpack.c.l.b16 %v602
  %v948 = vunpack.c.h.b16 %v602
  %v949 = vunpack.c.l.b16 %v603
  %v950 = vunpack.c.h.b16 %v603
  %v951 = vunpack.c.l.b16 %v604
  %v952 = vunpack.c.h.b16 %v604
  %v953 = vunpack.c.l.b16 %v605
  %v954 = vunpack.c.h.b16 %v605
  %v955 = vunpack.c.l.b16 %v606
  %v956 = vunpack.c.h.b16 %v606
  %v957 = vunpack.c.l.b16 %v607
  %v958 = vunpack.c.h.b16 %v607
  %v959 = vunpack.c.l.b16 %v608
  %v960 = vunpack.c.h.b16 %v608
  %v961 = vunpack.c.l.b16 %v609
  %v962 = vunpack.c.h.b16 %v609
  %v963 = vunpack.c.l.b16 %v610
  %v964 = vunpack.c.h.b16 %v610
  %v965 = vunpack.c.l.b16 %v611
  %v966 = vunpack.c.h.b16 %v611
  %v967 = vunpack.c.l.b16 %v612
  %v968 = vunpack.c.h.b16 %v612
  %v969 = vunpack.c.l.b16 %v613
  %v970 = vunpack.c.h.b16 %v613
  %v971 = vunpack.c.l.b16 %v614
  %v972 = vunpack.c.h.b16 %v614
  %v973 = vunpack.c.l.b16 %v615
  %v974 = vunpack.c.h.b16 %v615
  %v975 = vunpack.c.l.b16 %v616
  %v976 = vunpack.c.h.b16 %v616
  %v977 = vunpack.c.l.b16 %v617
  %v978 = vunpack.c.h.b16 %v617
  %v979 = vunpack.c.l.b16 %v618
  %v980 = vunpack.c.h.b16 %v618
  %v981 = vunpack.c.l.b16 %v619
  %v982 = vunpack.c.h.b16 %v619
  %v983 = vunpack.c.l.b16 %v620
  %v984 = vunpack.c.h.b16 %v620
  %v985 = vunpack.c.l.b16 %v621
  %v986 = vunpack.c.h.b16 %v621
  %v987 = vunpack.c.l.b16 %v622
  %v988 = vunpack.c.h.b16 %v622
  %v989 = vunpack.c.l.b16 %v623
  %v990 = vunpack.c.h.b16 %v623
  %v991 = vunpack.c.l.b16 %v624
  %v992 = vunpack.c.h.b16 %v624
  %v993 = vunpack.c.l.b16 %v625
  %v994 = vunpack.c.h.b16 %v625
  %v995 = vunpack.c.l.b16 %v626
  %v996 = vunpack.c.h.b16 %v626
  %v997 = vunpack.c.l.b16 %v627
  %v998 = vunpack.c.h.b16 %v627
  %v999 = vunpack.c.l.b16 %v628
  %v1000 = vunpack.c.h.b16 %v628
  %v1001 = vunpack.c.l.b16 %v629
  %v1002 = vunpack.c.h.b16 %v629
  %v1003 = vunpack.c.l.b16 %v630
  %v1004 = vunpack.c.h.b16 %v630
  %v1005 = vunpack.c.l.b16 %v631
  %v1006 = vunpack.c.h.b16 %v631
  %v1007 = vunpack.c.l.b16 %v632
  %v1008 = vunpack.c.h.b16 %v632
  %v1009 = vunpack.c.l.b16 %v633
  %v1010 = vunpack.c.h.b16 %v633
  %v1011 = vunpack.c.l.b16 %v634
  %v1012 = vunpack.c.h.b16 %v634
  %v1013 = vunpack.c.l.b16 %v635
  %v1014 = vunpack.c.h.b16 %v635
  %v1015 = vunpack.c.l.b16 %v636
  %v1016 = vunpack.c.h.b16 %v636
  %v1017 = vunpack.c.l.b16 %v637
  %v1018 = vunpack.c.h.b16 %v637
  %v1019 = vunpack.c.l.b16 %v638
  %v1020 = vunpack.c.h.b16 %v638
  %v1021 = vunpack.c.l.b16 %v639
  %v1022 = vunpack.c.h.b16 %v639
  %v1023 = vunpack.c.l.b16 %v640
  %v1024 = vunpack.c.h.b16 %v640
  %v1025 = vpack.c.b16 %v773, %v769
  %v1026 = vpack.c.b16 %v774, %v770
  %v1027 = vpack.c.b16 %v775, %v771
  %v1028 = vpack.c.b16 %v776, %v772
  %v1029 = vpack.c.b16 %v781, %v777
  %v1030 = vpack.c.b16 %v782, %v778
  %v1031 = vpack.c.b16 %v783, %v779
  %v1032 = vpack.c.b16 %v784, %v780
  %v1033 = vpack.c.b16 %v789, %v785
  %v1034 = vpack.c.b16 %v790, %v786
  %v1035 = vpack.c.b16 %v791, %v787
  %v1036 = vpack.c.b16 %v792, %v788
  %v1037 = vpack.c.b16 %v797, %v793
  %v1038 = vpack.c.b16 %v798, %v794
  %v1039 = vpack.c.b16 %v799, %v795
  %v1040 = vpack.c.b16 %v800, %v796
  %v1041 = vpack.c.b16 %v805, %v801
  %v1042 = vpack.c.b16 %v806, %v802
  %v1043 = vpack.c.b16 %v807, %v803
  %v1044 = vpack.c.b16 %v808, %v804
  %v1045 = vpack.c.b16 %v813, %v809
  %v1046 = vpack.c.b16 %v814, %v810
  %v1047 = vpack.c.b16 %v815, %v811
  %v1048 = vpack.c.b16 %v816, %v812
  %v1049 = vpack.c.b16 %v821, %v817
  %v1050 = vpack.c.b16 %v822, %v818
  %v1051 = vpack.c.b16 %v823, %v819
  %v1052 = vpack.c.b16 %v824, %v820
  %v1053 = vpack.c.b16 %v829, %v825
  %v1054 = vpack.c.b16 %v830, %v826
  %v1055 = vpack.c.b16 %v831, %v827
  %v1056 = vpack.c.b16 %v832, %v828
  %v1057 = vpack.c.b16 %v837, %v833
  %v1058 = vpack.c.b16 %v838, %v834
  %v1059 = vpack.c.b16 %v839, %v835
  %v1060 = vpack.c.b16 %v840, %v836
  %v1061 = vpack.c.b16 %v845, %v841
  %v1062 = vpack.c.b16 %v846, %v842
  %v1063 = vpack.c.b16 %v847, %v843
  %v1064 = vpack.c.b16 %v848, %v844
  %v1065 = vpack.c.b16 %v853, %v849
  %v1066 = vpack.c.b16 %v854, %v850
  %v1067 = vpack.c.b16 %v855, %v851
  %v1068 = vpack.c.b16 %v856, %v852
  %v1069 = vpack.c.b16 %v861, %v857
  %v1070 = vpack.c.b16 %v862, %v858
  %v1071 = vpack.c.b16 %v863, %v859
  %v1072 = vpack.c.b16 %v864, %v860
  %v1073 = vpack.c.b16 %v869, %v865
  %v1074 = vpack.c.b16 %v870, %v866
  %v1075 = vpack.c.b16 %v871, %v867
  %v1076 = vpack.c.b16 %v872, %v868
  %v1077 = vpack.c.b16 %v877, %v873
  %v1078 = vpack.c.b16 %v878, %v874
  %v1079 = vpack.c.b16 %v879, %v875
  %v1080 = vpack.c.b16 %v880, %v876
  %v1081 = vpack.c.b16 %v885, %v881
  %v1082 = vpack.c.b16 %v886, %v882
  %v1083 = vpack.c.b16 %v887, %v883
  %v1084 = vpack.c.b16 %v888, %v884
  %v1085 = vpack.c.b16 %v893, %v889
  %v1086 = vpack.c.b16 %v894, %v890
  %v1087 = vpack.c.b16 %v895, %v891
  %v1088 = vpack.c.b16 %v896, %v892
  %v1089 = vpack.c.b16 %v901, %v897
  %v1090 = vpack.c.b16 %v902, %v898
  %v1091 = vpack.c.b16 %v903, %v899
  %v1092 = vpack.c.b16 %v904, %v900
  %v1093 = vpack.c.b16 %v909, %v905
  %v1094 = vpack.c.b16 %v910, %v906
  %v1095 = vpack.c.b16 %v911, %v907
  %v1096 = vpack.c.b16 %v912, %v908
  %v1097 = vpack.c.b16 %v917, %v913
  %v1098 = vpack.c.b16 %v918, %v914
  %v1099 = vpack.c.b16 %v919, %v915
  %v1100 = vpack.c.b16 %v920, %v916
  %v1101 = vpack.c.b16 %v925, %v921
  %v1102 = vpack.c.b16 %v926, %v922
  %v1103 = vpack.c.b16 %v927, %v923
  %v1104 = vpack.c.b16 %v928, %v924
  %v1105 = vpack.c.b16 %v933, %v929
  %v1106 = vpack.c.b16 %v934, %v930
  %v1107 = vpack.c.b16 %v935, %v931
  %v1108 = vpack.c.b16 %v936, %v932
  %v1109 = vpack.c.b16 %v941, %v937
  %v1110 = vpack.c.b16 %v942, %v938
  %v1111 = vpack.c.b16 %v943, %v939
  %v1112 = vpack.c.b16 %v944, %v940
  %v1113 = vpack.c.b16 %v949, %v945
  %v1114 = vpack.c.b16 %v950, %v946
  %v1115 = vpack.c.b16 %v951, %v947
  %v1116 = vpack.c.b16 %v952, %v948
  %v1117 = vpack.c.b16 %v957, %v953
  %v1118 = vpack.c.b16 %v958, %v954
  %v1119 = vpack.c.b16 %v959, %v955
  %v1120 = vpack.c.b16 %v960, %v956
  %v1121 = vpack.c.b16 %v965, %v961
  %v1122 = vpack.c.b16 %v966, %v962
  %v1123 = vpack.c.b16 %v967, %v963
  %v1124 = vpack.c.b16 %v968, %v964
  %v1125 = vpack.c.b16 %v973, %v969
  %v1126 = vpack.c.b16 %v974, %v970
  %v1127 = vpack.c.b16 %v975, %v971
  %v1128 = vpack.c.b16 %v976, %v972
  %v1129 = vpack.c.b16 %v981, %v977
  %v1130 = vpack.c.b16 %v982, %v978
  %v1131 = vpack.c.b16 %v983, %v979
  %v1132 = vpack.c.b16 %v984, %v980
  %v1133 = vpack.c.b16 %v989, %v985
  %v1134 = vpack.c.b16 %v990, %v986
  %v1135 = vpack.c.b16 %v991, %v987
  %v1136 = vpack.c.b16 %v992, %v988
  %v1137 = vpack.c.b16 %v997, %v993
  %v1138 = vpack.c.b16 %v998, %v994
  %v1139 = vpack.c.b16 %v999, %v995
  %v1140 = vpack.c.b16 %v1000, %v996
  %v1141 = vpack.c.b16 %v1005, %v1001
  %v1142 = vpack.c.b16 %v1006, %v1002
  %v1143 = vpack.c.b16 %v1007, %v1003
  %v1144 = vpack.c.b16 %v1008, %v1004
  %v1145 = vpack.c.b16 %v1013, %v1009
  %v1146 = vpack.c.b16 %v1014, %v1010
  %v1147 = vpack.c.b16 %v1015, %v1011
  %v1148 = vpack.c.b16 %v1016, %v1012
  %v1149 = vpack.c.b16 %v1021, %v1017
  %v1150 = vpack.c.b16 %v1022, %v1018
  %v1151 = vpack.c.b16 %v1023, %v1019
  %v1152 = vpack.c.b16 %v1024, %v1020
  %1281 = vmatprep.subr.bf16.mxu0 %v1026
  %1282 = vmatpush1.bf16.msra.mxu0 %v1025
  %1283 = vmatprep.subr.bf16.mxu0 %v1030
  %1284 = vmatpush1.bf16.msra.mxu0 %v1029
  %1285 = vmatprep.subr.bf16.mxu0 %v1034
  %1286 = vmatpush1.bf16.msra.mxu0 %v1033
  %1287 = vmatprep.subr.bf16.mxu0 %v1038
  %1288 = vmatpush1.bf16.msra.mxu0 %v1037
  %1289 = vmatprep.subr.bf16.mxu0 %v1042
  %1290 = vmatpush1.bf16.msra.mxu0 %v1041
  %1291 = vmatprep.subr.bf16.mxu0 %v1046
  %1292 = vmatpush1.bf16.msra.mxu0 %v1045
  %1293 = vmatprep.subr.bf16.mxu0 %v1050
  %1294 = vmatpush1.bf16.msra.mxu0 %v1049
  %1295 = vmatprep.subr.bf16.mxu0 %v1054
  %1296 = vmatpush1.bf16.msra.mxu0 %v1053
  %1297 = vmatprep.subr.bf16.mxu0 %v1058
  %1298 = vmatpush1.bf16.msra.mxu0 %v1057
  %1299 = vmatprep.subr.bf16.mxu0 %v1062
  %1300 = vmatpush1.bf16.msra.mxu0 %v1061
  %1301 = vmatprep.subr.bf16.mxu0 %v1066
  %1302 = vmatpush1.bf16.msra.mxu0 %v1065
  %1303 = vmatprep.subr.bf16.mxu0 %v1070
  %1304 = vmatpush1.bf16.msra.mxu0 %v1069
  %1305 = vmatprep.subr.bf16.mxu0 %v1074
  %1306 = vmatpush1.bf16.msra.mxu0 %v1073
  %1307 = vmatprep.subr.bf16.mxu0 %v1078
  %1308 = vmatpush1.bf16.msra.mxu0 %v1077
  %1309 = vmatprep.subr.bf16.mxu0 %v1082
  %1310 = vmatpush1.bf16.msra.mxu0 %v1081
  %1311 = vmatprep.subr.bf16.mxu0 %v1086
  %1312 = vmatpush1.bf16.msra.mxu0 %v1085
  %1313 = vmatprep.mubr.bf16.mxu0 %v510
  %1314 = vmatmul.mubr.bf16.gmra.mrb[0].mxu0 %v509
  %v1315 = vpop.f32.mrb[0].mxu0
  %v1316 = vadd.f32 0.0, %v1315
  %v1317 = vpop.f32.mrb[0].mxu0
  %v1318 = vadd.f32 0.0, %v1317
  %v1319 = vpop.f32.mrb[0].mxu0
  %v1320 = vpop.f32.mrb[0].mxu0
  %1321 = vdwg.mxu0
  %1322 = vmatprep.subr.bf16.mxu0 %v1090
  %1323 = vmatpush1.bf16.msra.mxu0 %v1089
  %1324 = vmatprep.subr.bf16.mxu0 %v1094
  %1325 = vmatpush1.bf16.msra.mxu0 %v1093
  %1326 = vmatprep.subr.bf16.mxu0 %v1098
  %1327 = vmatpush1.bf16.msra.mxu0 %v1097
  %1328 = vmatprep.subr.bf16.mxu0 %v1102
  %1329 = vmatpush1.bf16.msra.mxu0 %v1101
  %1330 = vmatprep.subr.bf16.mxu0 %v1106
  %1331 = vmatpush1.bf16.msra.mxu0 %v1105
  %1332 = vmatprep.subr.bf16.mxu0 %v1110
  %1333 = vmatpush1.bf16.msra.mxu0 %v1109
  %1334 = vmatprep.subr.bf16.mxu0 %v1114
  %1335 = vmatpush1.bf16.msra.mxu0 %v1113
  %1336 = vmatprep.subr.bf16.mxu0 %v1118
  %1337 = vmatpush1.bf16.msra.mxu0 %v1117
  %1338 = vmatprep.subr.bf16.mxu0 %v1122
  %1339 = vmatpush1.bf16.msra.mxu0 %v1121
  %1340 = vmatprep.subr.bf16.mxu0 %v1126
  %1341 = vmatpush1.bf16.msra.mxu0 %v1125
  %1342 = vmatprep.subr.bf16.mxu0 %v1130
  %1343 = vmatpush1.bf16.msra.mxu0 %v1129
  %1344 = vmatprep.subr.bf16.mxu0 %v1134
  %1345 = vmatpush1.bf16.msra.mxu0 %v1133
  %1346 = vmatprep.subr.bf16.mxu0 %v1138
  %1347 = vmatpush1.bf16.msra.mxu0 %v1137
  %1348 = vmatprep.subr.bf16.mxu0 %v1142
  %1349 = vmatpush1.bf16.msra.mxu0 %v1141
  %1350 = vmatprep.subr.bf16.mxu0 %v1146
  %1351 = vmatpush1.bf16.msra.mxu0 %v1145
  %1352 = vmatprep.subr.bf16.mxu0 %v1150
  %1353 = vmatpush1.bf16.msra.mxu0 %v1149
  %1354 = vmatprep.mubr.bf16.mxu0 %v512
  %1355 = vmatmul.mubr.bf16.gmra.mrb[0].mxu0 %v511
  %v1356 = vpop.f32.mrb[0].mxu0
  %v1357 = vadd.f32 %v1316, %v1356
  %v1358 = vpop.f32.mrb[0].mxu0
  %v1359 = vadd.f32 %v1318, %v1358
  %v1360 = vpop.f32.mrb[0].mxu0
  %v1361 = vpop.f32.mrb[0].mxu0
  %1362 = vdwg.mxu0
  %1363 = vmatprep.subr.bf16.mxu0 %v1028
  %1364 = vmatpush1.bf16.msra.mxu0 %v1027
  %1365 = vmatprep.subr.bf16.mxu0 %v1032
  %1366 = vmatpush1.bf16.msra.mxu0 %v1031
  %1367 = vmatprep.subr.bf16.mxu0 %v1036
  %1368 = vmatpush1.bf16.msra.mxu0 %v1035
  %1369 = vmatprep.subr.bf16.mxu0 %v1040
  %1370 = vmatpush1.bf16.msra.mxu0 %v1039
  %1371 = vmatprep.subr.bf16.mxu0 %v1044
  %1372 = vmatpush1.bf16.msra.mxu0 %v1043
  %1373 = vmatprep.subr.bf16.mxu0 %v1048
  %1374 = vmatpush1.bf16.msra.mxu0 %v1047
  %1375 = vmatprep.subr.bf16.mxu0 %v1052
  %1376 = vmatpush1.bf16.msra.mxu0 %v1051
  %1377 = vmatprep.subr.bf16.mxu0 %v1056
  %1378 = vmatpush1.bf16.msra.mxu0 %v1055
  %1379 = vmatprep.subr.bf16.mxu0 %v1060
  %1380 = vmatpush1.bf16.msra.mxu0 %v1059
  %1381 = vmatprep.subr.bf16.mxu0 %v1064
  %1382 = vmatpush1.bf16.msra.mxu0 %v1063
  %1383 = vmatprep.subr.bf16.mxu0 %v1068
  %1384 = vmatpush1.bf16.msra.mxu0 %v1067
  %1385 = vmatprep.subr.bf16.mxu0 %v1072
  %1386 = vmatpush1.bf16.msra.mxu0 %v1071
  %1387 = vmatprep.subr.bf16.mxu0 %v1076
  %1388 = vmatpush1.bf16.msra.mxu0 %v1075
  %1389 = vmatprep.subr.bf16.mxu0 %v1080
  %1390 = vmatpush1.bf16.msra.mxu0 %v1079
  %1391 = vmatprep.subr.bf16.mxu0 %v1084
  %1392 = vmatpush1.bf16.msra.mxu0 %v1083
  %1393 = vmatprep.subr.bf16.mxu0 %v1088
  %1394 = vmatpush1.bf16.msra.mxu0 %v1087
  %1395 = vmatprep.mubr.bf16.mxu0 %v510
  %1396 = vmatmul.mubr.bf16.gmra.mrb[0].mxu0 %v509
  %v1397 = vpop.f32.mrb[0].mxu0
  %v1398 = vadd.f32 0.0, %v1397
  %v1399 = vpop.f32.mrb[0].mxu0
  %v1400 = vadd.f32 0.0, %v1399
  %v1401 = vpop.f32.mrb[0].mxu0
  %v1402 = vpop.f32.mrb[0].mxu0
  %1403 = vdwg.mxu0
  %1404 = vmatprep.subr.bf16.mxu0 %v1092
  %1405 = vmatpush1.bf16.msra.mxu0 %v1091
  %1406 = vmatprep.subr.bf16.mxu0 %v1096
  %1407 = vmatpush1.bf16.msra.mxu0 %v1095
  %1408 = vmatprep.subr.bf16.mxu0 %v1100
  %1409 = vmatpush1.bf16.msra.mxu0 %v1099
  %1410 = vmatprep.subr.bf16.mxu0 %v1104
  %1411 = vmatpush1.bf16.msra.mxu0 %v1103
  %1412 = vmatprep.subr.bf16.mxu0 %v1108
  %1413 = vmatpush1.bf16.msra.mxu0 %v1107
  %1414 = vmatprep.subr.bf16.mxu0 %v1112
  %1415 = vmatpush1.bf16.msra.mxu0 %v1111
  %1416 = vmatprep.subr.bf16.mxu0 %v1116
  %1417 = vmatpush1.bf16.msra.mxu0 %v1115
  %1418 = vmatprep.subr.bf16.mxu0 %v1120
  %1419 = vmatpush1.bf16.msra.mxu0 %v1119
  %1420 = vmatprep.subr.bf16.mxu0 %v1124
  %1421 = vmatpush1.bf16.msra.mxu0 %v1123
  %1422 = vmatprep.subr.bf16.mxu0 %v1128
  %1423 = vmatpush1.bf16.msra.mxu0 %v1127
  %1424 = vmatprep.subr.bf16.mxu0 %v1132
  %1425 = vmatpush1.bf16.msra.mxu0 %v1131
  %1426 = vmatprep.subr.bf16.mxu0 %v1136
  %1427 = vmatpush1.bf16.msra.mxu0 %v1135
  %1428 = vmatprep.subr.bf16.mxu0 %v1140
  %1429 = vmatpush1.bf16.msra.mxu0 %v1139
  %1430 = vmatprep.subr.bf16.mxu0 %v1144
  %1431 = vmatpush1.bf16.msra.mxu0 %v1143
  %1432 = vmatprep.subr.bf16.mxu0 %v1148
  %1433 = vmatpush1.bf16.msra.mxu0 %v1147
  %1434 = vmatprep.subr.bf16.mxu0 %v1152
  %1435 = vmatpush1.bf16.msra.mxu0 %v1151
  %1436 = vmatprep.mubr.bf16.mxu0 %v512
  %1437 = vmatmul.mubr.bf16.gmra.mrb[0].mxu0 %v511
  %v1438 = vpop.f32.mrb[0].mxu0
  %v1439 = vadd.f32 %v1398, %v1438
  %v1440 = vpop.f32.mrb[0].mxu0
  %v1441 = vadd.f32 %v1400, %v1440
  %v1442 = vpop.f32.mrb[0].mxu0
  %v1443 = vpop.f32.mrb[0].mxu0
  %1444 = vdwg.mxu0
  %1445 = vst [vmem:[%s10] sm:$0xff] %v1357
  %1446 = vst [vmem:[%s10 + $0x8] sm:$0xff] %v1359
  %1447 = vst [vmem:[%s10 + $0x10] sm:$0xff] %v1439
  %1448 = vst [vmem:[%s10 + $0x18] sm:$0xff] %v1441
  // Predicated region
  $region38: #{_forward_core.1} parent=0 // pred_check
    _
  $region39: #{_forward_core.1} parent=0 // pred_check_branch
    %1450 = sbr.rel (0) target = $region41
  $region40: #{_forward_core.1} parent=0 // pred_region
    _
  $region41: #{_forward_core.1} parent=0 // pred_fallthru
    _
  // Predicated region
  $region42: #{_forward_core.1} parent=0 // pred_check
    _
  $region43: #{_forward_core.1} parent=0 // pred_check_branch
    %1452 = sbr.rel (0) target = $region45
  $region44: #{_forward_core.1} parent=0 // pred_region
    _
  $region45: #{_forward_core.1} parent=0 // pred_fallthru
    _
  // Predicated region
  $region46: #{_forward_core.1} parent=0 // pred_check
    _
  $region47: #{_forward_core.1} parent=0 // pred_check_branch
    %1454 = sbr.rel (0) target = $region49
  $region48: #{_forward_core.1} parent=0 // pred_region
    _
  $region49: #{_forward_core.1} parent=0 // pred_fallthru
    _
  // Predicated region
  $region50: #{_forward_core.1} parent=0 // pred_check
    _
  $region51: #{_forward_core.1} parent=0 // pred_check_branch
    %1456 = sbr.rel (0) target = $region53
  $region52: #{_forward_core.1} parent=0 // pred_region
    _
  $region53: #{_forward_core.1} parent=0 // pred_fallthru
    _

</llo_original>
